<compile_context>
chip_gen: v7x
topology: tpu7x:2x2x1
jax: 0.10.0
libtpu: 0.0.40
codegen_flags: <defaults>
</compile_context>

<pallas_src>
import functools

import jax
import jax.numpy as jnp
from jax.experimental import pallas as pl
from jax.experimental.pallas import tpu as pltpu


def _round_up(x, m):
    return (x + m - 1) // m * m


def _pick_batch_block(B):
    """Largest divisor of B that is <= 8 while keeping >= 2 grid steps (v7x megacore)."""
    if B < 4:
        return 1
    bb = min(8, B // 2)
    while B % bb:
        bb -= 1
    return max(bb, 1)


# ---------------------------------------------------------------------------
# Fused kernel: conv(3x3 as one K=9C matmul) + bias + ReLU + global avg pool
#               + MLP head + L2 normalize.   One grid step per batch block.
# ---------------------------------------------------------------------------
def _fused_kernel(x_ref, wc_ref, bc_ref, pool_ref, w1_ref, b1_ref, w2_ref, b2_ref,
                  o_ref, *, BB):
    # x_ref:    (BB*HW, Kp) bf16   im2col patches for BB images (Kp = pad(9*C, 128))
    # wc_ref:   (Kp, Dp)    bf16   conv weight, tap-major rows, zero-padded
    # bc_ref:   (1, Dp)     f32    conv bias
    # pool_ref: (MR, BB*HW) f32    block-diag 1/(H*W) mean matrix, rows padded to MR>=8
    # w1/b1/w2/b2:                 MLP head (bf16 weights, f32 biases), zero-padded
    # o_ref:    (1, BB, Fp) f32    L2-normalized features

    # 3x3 conv as a single K=9C matmul (bf16 operands, f32 accumulation on the MXU).
    conv = jnp.dot(x_ref[...], wc_ref[...], preferred_element_type=jnp.float32)
    act = jnp.maximum(conv + bc_ref[...], 0.0)                      # bias + ReLU, f32

    # Global average pool as an MXU dot (keeps the reduction off the VPU/XLU).
    pooled = jnp.dot(pool_ref[...], act,
                     preferred_element_type=jnp.float32)            # (MR, Dp) f32

    # MLP contrastive head: Linear -> ReLU -> Linear (bf16 operands, f32 accum).
    h = jnp.dot(pooled.astype(jnp.bfloat16), w1_ref[...],
                preferred_element_type=jnp.float32) + b1_ref[...]
    h = jnp.maximum(h, 0.0)
    f = jnp.dot(h.astype(jnp.bfloat16), w2_ref[...],
                preferred_element_type=jnp.float32) + b2_ref[...]   # (MR, Fp) f32

    # Keep only the BB real images (rows >= BB came from zero pool rows).
    f = f[:BB, :]

    # F.normalize(dim=1): x / max(||x||, 1e-12) == x * rsqrt(max(||x||^2, 1e-24)).
    sumsq = jnp.sum(f * f, axis=1, keepdims=True)
    inv = jax.lax.rsqrt(jnp.maximum(sumsq, 1e-24))
    o_ref[...] = ((f * inv)[None, :, :]).astype(o_ref.dtype)


def prepare_params(params):
    """Pad params to lane-dense widths and cast matmul weights to bf16 (done once)."""
    K, D = params["wc"].shape
    Fdim = params["w2"].shape[-1]
    Kp, Dp, Fp = _round_up(K, 128), _round_up(D, 128), _round_up(Fdim, 128)
    return {
        "wc": jnp.pad(params["wc"], ((0, Kp - K), (0, Dp - D))).astype(jnp.bfloat16),
        "bc": jnp.pad(params["bc"], ((0, 0), (0, Dp - D))),
        "w1": jnp.pad(params["w1"], ((0, Dp - D), (0, Dp - D))).astype(jnp.bfloat16),
        "b1": jnp.pad(params["b1"], ((0, 0), (0, Dp - D))),
        "w2": jnp.pad(params["w2"], ((0, Dp - D), (0, Fp - Fdim))).astype(jnp.bfloat16),
        "b2": jnp.pad(params["b2"], ((0, 0), (0, Fp - Fdim))),
    }


def contrastive_model_forward(x_nchw, pparams, *, features_dim):
    """Forward pass of ContrastiveModel.  x_nchw: (B, C, H, W) float32."""
    B, C, H, W = x_nchw.shape
    HW = H * W
    K = 9 * C
    Kp, Dp = pparams["wc"].shape
    Fp = pparams["w2"].shape[-1]

    # im2col in the wrapper (cheap at these sizes; padded channels are zero so the
    # K-padding is numerically exact).  Row order: image-major, then (h, w).
    x_nhwc = jnp.transpose(x_nchw, (0, 2, 3, 1))
    xp = jnp.pad(x_nhwc, ((0, 0), (1, 1), (1, 1), (0, 0)))
    cols = [xp[:, i:i + H, j:j + W, :] for i in range(3) for j in range(3)]
    patches = jnp.concatenate(cols, axis=-1).reshape(B * HW, K)
    patches = jnp.pad(patches, ((0, 0), (0, Kp - K))).astype(jnp.bfloat16)

    # Batch blocking: amortize per-grid-step overhead, keep >= 2 steps for megacore.
    BB = _pick_batch_block(B)
    nblk = B // BB
    MR = _round_up(max(BB, 8), 8)  # sublane-aligned M for the pool/head matmuls
    pool_core = jnp.kron(jnp.eye(BB, dtype=jnp.float32),
                         jnp.full((1, HW), 1.0 / HW, jnp.float32))  # (BB, BB*HW)
    pool_mat = jnp.pad(pool_core, ((0, MR - BB), (0, 0)))           # (MR, BB*HW)

    kernel = functools.partial(_fused_kernel, BB=BB)
    out = pl.pallas_call(
        kernel,
        out_shape=jax.ShapeDtypeStruct((nblk, BB, Fp), jnp.float32),
        grid=(nblk,),
        in_specs=[
            pl.BlockSpec((BB * HW, Kp), lambda i: (i, 0)),      # patches (per block)
            pl.BlockSpec((Kp, Dp), lambda i: (0, 0)),           # conv weight (resident)
            pl.BlockSpec((1, Dp), lambda i: (0, 0)),            # conv bias
            pl.BlockSpec((MR, BB * HW), lambda i: (0, 0)),      # pooling matrix
            pl.BlockSpec((Dp, Dp), lambda i: (0, 0)),           # head w1
            pl.BlockSpec((1, Dp), lambda i: (0, 0)),            # head b1
            pl.BlockSpec((Dp, Fp), lambda i: (0, 0)),           # head w2
            pl.BlockSpec((1, Fp), lambda i: (0, 0)),            # head b2
        ],
        out_specs=pl.BlockSpec((1, BB, Fp), lambda i: (i, 0, 0)),
        compiler_params=pltpu.CompilerParams(
            dimension_semantics=("parallel",)),                 # shard batch across TCs
    )(patches, pparams["wc"], pparams["bc"], pool_mat,
      pparams["w1"], pparams["b1"], pparams["w2"], pparams["b2"])

    return out.reshape(B, Fp)[:, :features_dim]


def init_params(key, c_in, backbone_dim, features_dim):
    k = jax.random.split(key, 6)
    scale = 0.05
    return {
        "wc": scale * jax.random.normal(k[0], (9 * c_in, backbone_dim), jnp.float32),
        "bc": scale * jax.random.normal(k[1], (1, backbone_dim), jnp.float32),
        "w1": scale * jax.random.normal(k[2], (backbone_dim, backbone_dim), jnp.float32),
        "b1": scale * jax.random.normal(k[3], (1, backbone_dim), jnp.float32),
        "w2": scale * jax.random.normal(k[4], (backbone_dim, features_dim), jnp.float32),
        "b2": scale * jax.random.normal(k[5], (1, features_dim), jnp.float32),
    }


def reference_forward(x_nchw, params):
    """Pure-JAX reference (same math as the PyTorch module)."""
    B, C, H, W = x_nchw.shape
    x = jnp.transpose(x_nchw, (0, 2, 3, 1))
    xp = jnp.pad(x, ((0, 0), (1, 1), (1, 1), (0, 0)))
    cols = [xp[:, i:i + H, j:j + W, :] for i in range(3) for j in range(3)]
    patches = jnp.stack(cols, axis=3).reshape(B * H * W, 9 * C)
    conv = jnp.maximum(patches @ params["wc"] + params["bc"], 0.0)
    pooled = conv.reshape(B, H * W, -1).mean(axis=1)
    h = jnp.maximum(pooled @ params["w1"] + params["b1"], 0.0)
    f = h @ params["w2"] + params["b2"]
    n = jnp.sqrt(jnp.sum(f * f, axis=1, keepdims=True))
    return f / jnp.maximum(n, 1e-12)


if __name__ == "__main__":
    B, C, H, W = 2, 4, 16, 16
    backbone_dim = 32
    features_dim = 128   # module default

    key = jax.random.PRNGKey(0)
    kx, kp = jax.random.split(key)
    x = jax.random.normal(kx, (B, C, H, W), jnp.float32)
    params = init_params(kp, C, backbone_dim, features_dim)
    pparams = prepare_params(params)   # padding/bf16 cast hoisted out of the forward

    fwd = jax.jit(functools.partial(contrastive_model_forward,
                                    features_dim=features_dim))
    out = jax.block_until_ready(fwd(x, pparams))

    assert out.shape == (B, features_dim)
    # Each row should be unit-norm after F.normalize(dim=1).
    norms = jnp.linalg.norm(out, axis=1)
    assert bool(jnp.all(jnp.abs(norms - 1.0) < 1e-3)), "output rows not unit-norm"
    # Check against a pure-JAX reference (tolerance covers bf16-operand matmuls).
    ref = reference_forward(x, params)
    assert bool(jnp.all(jnp.abs(out - ref) < 5e-3)), "mismatch vs pure-JAX reference"

    print("KERNEL_OK")
</pallas_src>

<mosaic_0001>
module attributes {stable_mosaic.version = 11 : i64} {
  func.func @_fused_kernel(%arg0: i32, %arg1: memref<256x128xbf16, #tpu.memory_space<vmem>>, %arg2: memref<128x128xbf16, #tpu.memory_space<vmem>>, %arg3: memref<1x128xf32, #tpu.memory_space<vmem>>, %arg4: memref<8x256xf32, #tpu.memory_space<vmem>>, %arg5: memref<128x128xbf16, #tpu.memory_space<vmem>>, %arg6: memref<1x128xf32, #tpu.memory_space<vmem>>, %arg7: memref<128x128xbf16, #tpu.memory_space<vmem>>, %arg8: memref<1x128xf32, #tpu.memory_space<vmem>>, %arg9: memref<1x1x128xf32, #tpu.memory_space<vmem>>) attributes {dimension_semantics = [#tpu.dimension_semantics<parallel>], iteration_bounds = array<i64: 2>, scalar_prefetch = 0 : i64, scratch_operands = 0 : i64, tpu.core_type = #tpu.core_type<tc>, window_params = [{transform_indices = @transform_0, window_bounds = array<i64: 256, 128>}, {pipeline_mode = #tpu.pipeline_mode<synchronous>, transform_indices = @transform_1, window_bounds = array<i64: 128, 128>}, {pipeline_mode = #tpu.pipeline_mode<synchronous>, transform_indices = @transform_2, window_bounds = array<i64: 1, 128>}, {pipeline_mode = #tpu.pipeline_mode<synchronous>, transform_indices = @transform_3, window_bounds = array<i64: 8, 256>}, {pipeline_mode = #tpu.pipeline_mode<synchronous>, transform_indices = @transform_4, window_bounds = array<i64: 128, 128>}, {pipeline_mode = #tpu.pipeline_mode<synchronous>, transform_indices = @transform_5, window_bounds = array<i64: 1, 128>}, {pipeline_mode = #tpu.pipeline_mode<synchronous>, transform_indices = @transform_6, window_bounds = array<i64: 128, 128>}, {pipeline_mode = #tpu.pipeline_mode<synchronous>, transform_indices = @transform_7, window_bounds = array<i64: 1, 128>}, {transform_indices = @transform_8, window_bounds = array<i64: 1, 1, 128>}]} {
    %c0 = arith.constant 0 : index
    %c0_0 = arith.constant 0 : index
    %0 = vector.load %arg1[%c0, %c0_0] : memref<256x128xbf16, #tpu.memory_space<vmem>>, vector<256x128xbf16>
    %c0_1 = arith.constant 0 : index
    %c0_2 = arith.constant 0 : index
    %1 = vector.load %arg2[%c0_1, %c0_2] : memref<128x128xbf16, #tpu.memory_space<vmem>>, vector<128x128xbf16>
    %cst = arith.constant dense<0.000000e+00> : vector<256x128xf32>
    %2 = tpu.matmul %0, %1, %cst {dimension_numbers = #tpu.dot_dimension_numbers<[1], [0], [0], [1], [0, 0, 1, 1], [], []>} : vector<256x128xbf16>, vector<128x128xbf16>, vector<256x128xf32> -> vector<256x128xf32>
    %c0_3 = arith.constant 0 : index
    %c0_4 = arith.constant 0 : index
    %3 = vector.load %arg3[%c0_3, %c0_4] : memref<1x128xf32, #tpu.memory_space<vmem>>, vector<1x128xf32>
    %4 = vector.broadcast %3 : vector<1x128xf32> to vector<256x128xf32>
    %5 = arith.addf %2, %4 : vector<256x128xf32>
    %cst_5 = arith.constant 0.000000e+00 : f32
    %6 = vector.broadcast %cst_5 : f32 to vector<256x128xf32>
    %7 = arith.maximumf %5, %6 : vector<256x128xf32>
    %c0_6 = arith.constant 0 : index
    %c0_7 = arith.constant 0 : index
    %8 = vector.load %arg4[%c0_6, %c0_7] : memref<8x256xf32, #tpu.memory_space<vmem>>, vector<8x256xf32>
    %cst_8 = arith.constant dense<0.000000e+00> : vector<8x128xf32>
    %9 = tpu.matmul %8, %7, %cst_8 {dimension_numbers = #tpu.dot_dimension_numbers<[1], [0], [0], [1], [0, 0, 1, 1], [], []>} : vector<8x256xf32>, vector<256x128xf32>, vector<8x128xf32> -> vector<8x128xf32>
    %10 = arith.truncf %9 : vector<8x128xf32> to vector<8x128xbf16>
    %c0_9 = arith.constant 0 : index
    %c0_10 = arith.constant 0 : index
    %11 = vector.load %arg5[%c0_9, %c0_10] : memref<128x128xbf16, #tpu.memory_space<vmem>>, vector<128x128xbf16>
    %cst_11 = arith.constant dense<0.000000e+00> : vector<8x128xf32>
    %12 = tpu.matmul %10, %11, %cst_11 {dimension_numbers = #tpu.dot_dimension_numbers<[1], [0], [0], [1], [0, 0, 1, 1], [], []>} : vector<8x128xbf16>, vector<128x128xbf16>, vector<8x128xf32> -> vector<8x128xf32>
    %c0_12 = arith.constant 0 : index
    %c0_13 = arith.constant 0 : index
    %13 = vector.load %arg6[%c0_12, %c0_13] : memref<1x128xf32, #tpu.memory_space<vmem>>, vector<1x128xf32>
    %14 = vector.broadcast %13 : vector<1x128xf32> to vector<8x128xf32>
    %15 = arith.addf %12, %14 : vector<8x128xf32>
    %cst_14 = arith.constant 0.000000e+00 : f32
    %16 = vector.broadcast %cst_14 : f32 to vector<8x128xf32>
    %17 = arith.maximumf %15, %16 : vector<8x128xf32>
    %18 = arith.truncf %17 : vector<8x128xf32> to vector<8x128xbf16>
    %c0_15 = arith.constant 0 : index
    %c0_16 = arith.constant 0 : index
    %19 = vector.load %arg7[%c0_15, %c0_16] : memref<128x128xbf16, #tpu.memory_space<vmem>>, vector<128x128xbf16>
    %cst_17 = arith.constant dense<0.000000e+00> : vector<8x128xf32>
    %20 = tpu.matmul %18, %19, %cst_17 {dimension_numbers = #tpu.dot_dimension_numbers<[1], [0], [0], [1], [0, 0, 1, 1], [], []>} : vector<8x128xbf16>, vector<128x128xbf16>, vector<8x128xf32> -> vector<8x128xf32>
    %c0_18 = arith.constant 0 : index
    %c0_19 = arith.constant 0 : index
    %21 = vector.load %arg8[%c0_18, %c0_19] : memref<1x128xf32, #tpu.memory_space<vmem>>, vector<1x128xf32>
    %22 = vector.broadcast %21 : vector<1x128xf32> to vector<8x128xf32>
    %23 = arith.addf %20, %22 : vector<8x128xf32>
    %24 = vector.extract_strided_slice %23 {offsets = [0, 0], sizes = [1, 128], strides = [1, 1]} : vector<8x128xf32> to vector<1x128xf32>
    %25 = arith.mulf %24, %24 : vector<1x128xf32>
    %cst_20 = arith.constant dense<0.000000e+00> : vector<1xf32>
    %26 = vector.multi_reduction <add>, %25, %cst_20 [1] : vector<1x128xf32> to vector<1xf32>
    %27 = vector.shape_cast %26 : vector<1xf32> to vector<1x1xf32>
    %cst_21 = arith.constant 1.000000e-24 : f32
    %28 = vector.broadcast %cst_21 : f32 to vector<1x1xf32>
    %29 = arith.maximumf %27, %28 : vector<1x1xf32>
    %30 = math.rsqrt %29 : vector<1x1xf32>
    %31 = vector.broadcast %30 : vector<1x1xf32> to vector<1x128xf32>
    %32 = arith.mulf %24, %31 : vector<1x128xf32>
    %33 = vector.shape_cast %32 : vector<1x128xf32> to vector<1x1x128xf32>
    %c0_22 = arith.constant 0 : index
    %c0_23 = arith.constant 0 : index
    %c0_24 = arith.constant 0 : index
    %34 = vector.load %arg9[%c0_22, %c0_23, %c0_24] : memref<1x1x128xf32, #tpu.memory_space<vmem>>, vector<1x1x128xf32>
    tpu.vector_store %arg9[%c0_22, %c0_23, %c0_24], %33 {strides = array<i32>} : memref<1x1x128xf32, #tpu.memory_space<vmem>>, vector<1x1x128xf32>,
    return
  }
  func.func @transform_0(%arg0: i32) -> (i32, i32) {
    %c0_i32 = arith.constant 0 : i32
    %c0_i32_0 = arith.constant 0 : i32
    return %arg0, %c0_i32 : i32, i32
  }
  func.func @transform_1(%arg0: i32) -> (i32, i32) {
    %c0_i32 = arith.constant 0 : i32
    %c0_i32_0 = arith.constant 0 : i32
    %c0_i32_1 = arith.constant 0 : i32
    return %c0_i32, %c0_i32_0 : i32, i32
  }
  func.func @transform_2(%arg0: i32) -> (i32, i32) {
    %c0_i32 = arith.constant 0 : i32
    %c0_i32_0 = arith.constant 0 : i32
    %c0_i32_1 = arith.constant 0 : i32
    return %c0_i32, %c0_i32_0 : i32, i32
  }
  func.func @transform_3(%arg0: i32) -> (i32, i32) {
    %c0_i32 = arith.constant 0 : i32
    %c0_i32_0 = arith.constant 0 : i32
    %c0_i32_1 = arith.constant 0 : i32
    return %c0_i32, %c0_i32_0 : i32, i32
  }
  func.func @transform_4(%arg0: i32) -> (i32, i32) {
    %c0_i32 = arith.constant 0 : i32
    %c0_i32_0 = arith.constant 0 : i32
    %c0_i32_1 = arith.constant 0 : i32
    return %c0_i32, %c0_i32_0 : i32, i32
  }
  func.func @transform_5(%arg0: i32) -> (i32, i32) {
    %c0_i32 = arith.constant 0 : i32
    %c0_i32_0 = arith.constant 0 : i32
    %c0_i32_1 = arith.constant 0 : i32
    return %c0_i32, %c0_i32_0 : i32, i32
  }
  func.func @transform_6(%arg0: i32) -> (i32, i32) {
    %c0_i32 = arith.constant 0 : i32
    %c0_i32_0 = arith.constant 0 : i32
    %c0_i32_1 = arith.constant 0 : i32
    return %c0_i32, %c0_i32_0 : i32, i32
  }
  func.func @transform_7(%arg0: i32) -> (i32, i32) {
    %c0_i32 = arith.constant 0 : i32
    %c0_i32_0 = arith.constant 0 : i32
    %c0_i32_1 = arith.constant 0 : i32
    return %c0_i32, %c0_i32_0 : i32, i32
  }
  func.func @transform_8(%arg0: i32) -> (i32, i32, i32) {
    %c0_i32 = arith.constant 0 : i32
    %c0_i32_0 = arith.constant 0 : i32
    %c0_i32_1 = arith.constant 0 : i32
    return %arg0, %c0_i32, %c0_i32_0 : i32, i32, i32
  }
}

</mosaic_0001>

<llo_original>
// kernel: contrastive_model_forward.1
$region0: #{contrastive_model_forward.1}
  #allocation0 [shape = 'u32[]', space=smem, size = 0x4, offset = 0x4, fixed_abs, tag = 'smem constant byte address 0x4 - core index']
  #allocation1 [shape = 'u32[144,128]{1,0:T(1,128)}', space=vmem, size = 0x12000, scoped, tag = 'internal scratch']
  %s0 = inlined_call_operand.vmem [shape: bf16[512,128], index: 0, kind: input, shape index: {}]
  %s1 = inlined_call_operand.vmem [shape: bf16[128,128], index: 1, kind: input, shape index: {}]
  %s2 = inlined_call_operand.vmem [shape: f32[1,128], index: 2, kind: input, shape index: {}]
  %s3 = inlined_call_operand.vmem [shape: f32[8,256], index: 3, kind: input, shape index: {}]
  %s4 = inlined_call_operand.vmem [shape: bf16[128,128], index: 4, kind: input, shape index: {}]
  %s5 = inlined_call_operand.vmem [shape: f32[1,128], index: 5, kind: input, shape index: {}]
  %s6 = inlined_call_operand.vmem [shape: bf16[128,128], index: 6, kind: input, shape index: {}]
  %s7 = inlined_call_operand.vmem [shape: f32[1,128], index: 7, kind: input, shape index: {}]
  %s8 = inlined_call_operand.hbm [shape: f32[2,1,128], index: 8, kind: output, shape index: {}]
  %s9 = sld [smem:[#allocation0]]
  $region65: #{contrastive_model_forward.1} parent=0
    _
  %s11 = ssub.s32 1, %s9
  %s12 = scalar_select 0, %s11, %s9
  $region1: #{contrastive_model_forward.1} parent=0
    #allocation2 [shape = 'u8[1024]{0}', space=vmem, size = 0x400, scoped, tag = 'output window, operand 0']
    #allocation3 [shape = 's32[2]{0}', space=sflag, size = 0x8, scoped, tag = 'scoped memory for contrastive_model_forward.1']
    %13 = vsyncpa [#allocation3], 0
    %s14 = scalar_lea.sflag [#allocation3], 1
    %15 = vsyncpa %s14, 0
    loop: start=0, step=1, limit=4
    $region2: #{contrastive_model_forward.1} parent=1 // loop_pre_header
      _
    $region3: #{contrastive_model_forward.1} parent=1 // loop_header
      %s17 = sphi 0, %s21
      %p18 = scmp.ge.s32.totalorder %s17, 4
      %s27 = sphi 0, %s29
      %s30 = sphi 0, %s27
      %s31 = sphi 0, %s30
      %s47 = sphi 0, %s31
      %s51 = sphi 0, %s51
      %s53 = sphi 0, %s51
      %s54 = sphi 0, %s53
      %s68 = sphi 0, %s54
      %s72 = sphi 0, %s72
      %s74 = sphi 0, %s72
      %s75 = sphi 0, %s74
      %s89 = sphi 0, %s75
      %s93 = sphi 0, %s93
      %s95 = sphi 0, %s93
      %s96 = sphi 0, %s95
      %s110 = sphi 0, %s96
      %s114 = sphi 0, %s114
      %s116 = sphi 0, %s114
      %s117 = sphi 0, %s116
      %s131 = sphi 0, %s117
      %s135 = sphi 0, %s135
      %s137 = sphi 0, %s135
      %s138 = sphi 0, %s137
      %s152 = sphi 0, %s138
      %s156 = sphi 0, %s156
      %s158 = sphi 0, %s156
      %s159 = sphi 0, %s158
      %s173 = sphi 0, %s159
      %s177 = sphi 0, %s177
      %s179 = sphi 0, %s177
      %s180 = sphi 0, %s179
      %s194 = sphi 0, %s180
      %s200 = sphi 0, %s202
      %s203 = sphi 0, %s200
      %s204 = sphi 0, %s203
      %s220 = sphi 0, %s204
    $region4: #{contrastive_model_forward.1} parent=1 // loop_header_branch
      %20 = sbr.rel (%p18) target = $region8
    $region5: #{contrastive_model_forward.1} parent=1 // loop_body
      %s22 = ssub.s32 %s17, 1
      %s23 = ssub.s32 %s17, 2
      %s24 = sadd.s32 %s17, 1
      %s25 = ssub.s32 %s17, %s24
      %p26 = scmp.eq.s32.totalorder %s25, 0
      %s28 = sadd.s32 %s27, 1
      %s29 = scalar_select %p26, %s27, %s28
      %p32 = pneg %p26
      %p33 = scmp.eq.s32.totalorder %s17, 1
      %p34 = por %p32, %p33
      %p35 = scmp.ne.s32.totalorder %s27, %s30
      %p36 = scmp.eq.s32.totalorder %s17, 0
      %p37 = por %p35, %p36
      %p38 = scmp.ne.s32.totalorder %s27, %s30
      %p39 = scmp.eq.s32.totalorder %s22, 1
      %p40 = por %p38, %p39
      %p41 = scmp.ne.s32.totalorder %s30, %s31
      %p42 = scmp.eq.s32.totalorder %s22, 0
      %p43 = por %p41, %p42
      %p44 = scmp.ne.s32.totalorder %s30, %s31
      %p45 = scmp.eq.s32.totalorder %s23, 1
      %p46 = por %p44, %p45
      %p48 = scmp.ne.s32.totalorder %s31, %s47
      %p49 = scmp.eq.s32.totalorder %s23, 0
      %p50 = por %p48, %p49
      %s52 = sadd.s32 %s51, 1
      %p55 = scmp.eq.s32.totalorder %s17, 1
      %p56 = scmp.ne.s32.totalorder %s51, %s53
      %p57 = scmp.eq.s32.totalorder %s17, 0
      %p58 = por %p56, %p57
      %p59 = scmp.ne.s32.totalorder %s51, %s53
      %p60 = scmp.eq.s32.totalorder %s22, 1
      %p61 = por %p59, %p60
      %p62 = scmp.ne.s32.totalorder %s53, %s54
      %p63 = scmp.eq.s32.totalorder %s22, 0
      %p64 = por %p62, %p63
      %p65 = scmp.ne.s32.totalorder %s53, %s54
      %p66 = scmp.eq.s32.totalorder %s23, 1
      %p67 = por %p65, %p66
      %p69 = scmp.ne.s32.totalorder %s54, %s68
      %p70 = scmp.eq.s32.totalorder %s23, 0
      %p71 = por %p69, %p70
      %s73 = sadd.s32 %s72, 1
      %p76 = scmp.eq.s32.totalorder %s17, 1
      %p77 = scmp.ne.s32.totalorder %s72, %s74
      %p78 = scmp.eq.s32.totalorder %s17, 0
      %p79 = por %p77, %p78
      %p80 = scmp.ne.s32.totalorder %s72, %s74
      %p81 = scmp.eq.s32.totalorder %s22, 1
      %p82 = por %p80, %p81
      %p83 = scmp.ne.s32.totalorder %s74, %s75
      %p84 = scmp.eq.s32.totalorder %s22, 0
      %p85 = por %p83, %p84
      %p86 = scmp.ne.s32.totalorder %s74, %s75
      %p87 = scmp.eq.s32.totalorder %s23, 1
      %p88 = por %p86, %p87
      %p90 = scmp.ne.s32.totalorder %s75, %s89
      %p91 = scmp.eq.s32.totalorder %s23, 0
      %p92 = por %p90, %p91
      %s94 = sadd.s32 %s93, 1
      %p97 = scmp.eq.s32.totalorder %s17, 1
      %p98 = scmp.ne.s32.totalorder %s93, %s95
      %p99 = scmp.eq.s32.totalorder %s17, 0
      %p100 = por %p98, %p99
      %p101 = scmp.ne.s32.totalorder %s93, %s95
      %p102 = scmp.eq.s32.totalorder %s22, 1
      %p103 = por %p101, %p102
      %p104 = scmp.ne.s32.totalorder %s95, %s96
      %p105 = scmp.eq.s32.totalorder %s22, 0
      %p106 = por %p104, %p105
      %p107 = scmp.ne.s32.totalorder %s95, %s96
      %p108 = scmp.eq.s32.totalorder %s23, 1
      %p109 = por %p107, %p108
      %p111 = scmp.ne.s32.totalorder %s96, %s110
      %p112 = scmp.eq.s32.totalorder %s23, 0
      %p113 = por %p111, %p112
      %s115 = sadd.s32 %s114, 1
      %p118 = scmp.eq.s32.totalorder %s17, 1
      %p119 = scmp.ne.s32.totalorder %s114, %s116
      %p120 = scmp.eq.s32.totalorder %s17, 0
      %p121 = por %p119, %p120
      %p122 = scmp.ne.s32.totalorder %s114, %s116
      %p123 = scmp.eq.s32.totalorder %s22, 1
      %p124 = por %p122, %p123
      %p125 = scmp.ne.s32.totalorder %s116, %s117
      %p126 = scmp.eq.s32.totalorder %s22, 0
      %p127 = por %p125, %p126
      %p128 = scmp.ne.s32.totalorder %s116, %s117
      %p129 = scmp.eq.s32.totalorder %s23, 1
      %p130 = por %p128, %p129
      %p132 = scmp.ne.s32.totalorder %s117, %s131
      %p133 = scmp.eq.s32.totalorder %s23, 0
      %p134 = por %p132, %p133
      %s136 = sadd.s32 %s135, 1
      %p139 = scmp.eq.s32.totalorder %s17, 1
      %p140 = scmp.ne.s32.totalorder %s135, %s137
      %p141 = scmp.eq.s32.totalorder %s17, 0
      %p142 = por %p140, %p141
      %p143 = scmp.ne.s32.totalorder %s135, %s137
      %p144 = scmp.eq.s32.totalorder %s22, 1
      %p145 = por %p143, %p144
      %p146 = scmp.ne.s32.totalorder %s137, %s138
      %p147 = scmp.eq.s32.totalorder %s22, 0
      %p148 = por %p146, %p147
      %p149 = scmp.ne.s32.totalorder %s137, %s138
      %p150 = scmp.eq.s32.totalorder %s23, 1
      %p151 = por %p149, %p150
      %p153 = scmp.ne.s32.totalorder %s138, %s152
      %p154 = scmp.eq.s32.totalorder %s23, 0
      %p155 = por %p153, %p154
      %s157 = sadd.s32 %s156, 1
      %p160 = scmp.eq.s32.totalorder %s17, 1
      %p161 = scmp.ne.s32.totalorder %s156, %s158
      %p162 = scmp.eq.s32.totalorder %s17, 0
      %p163 = por %p161, %p162
      %p164 = scmp.ne.s32.totalorder %s156, %s158
      %p165 = scmp.eq.s32.totalorder %s22, 1
      %p166 = por %p164, %p165
      %p167 = scmp.ne.s32.totalorder %s158, %s159
      %p168 = scmp.eq.s32.totalorder %s22, 0
      %p169 = por %p167, %p168
      %p170 = scmp.ne.s32.totalorder %s158, %s159
      %p171 = scmp.eq.s32.totalorder %s23, 1
      %p172 = por %p170, %p171
      %p174 = scmp.ne.s32.totalorder %s159, %s173
      %p175 = scmp.eq.s32.totalorder %s23, 0
      %p176 = por %p174, %p175
      %s178 = sadd.s32 %s177, 1
      %p181 = scmp.eq.s32.totalorder %s17, 1
      %p182 = scmp.ne.s32.totalorder %s177, %s179
      %p183 = scmp.eq.s32.totalorder %s17, 0
      %p184 = por %p182, %p183
      %p185 = scmp.ne.s32.totalorder %s177, %s179
      %p186 = scmp.eq.s32.totalorder %s22, 1
      %p187 = por %p185, %p186
      %p188 = scmp.ne.s32.totalorder %s179, %s180
      %p189 = scmp.eq.s32.totalorder %s22, 0
      %p190 = por %p188, %p189
      %p191 = scmp.ne.s32.totalorder %s179, %s180
      %p192 = scmp.eq.s32.totalorder %s23, 1
      %p193 = por %p191, %p192
      %p195 = scmp.ne.s32.totalorder %s180, %s194
      %p196 = scmp.eq.s32.totalorder %s23, 0
      %p197 = por %p195, %p196
      %s198 = ssub.s32 %s17, %s24
      %p199 = scmp.eq.s32.totalorder %s198, 0
      %s201 = sadd.s32 %s200, 1
      %s202 = scalar_select %p199, %s200, %s201
      %p205 = pneg %p199
      %p206 = scmp.eq.s32.totalorder %s17, 1
      %p207 = por %p205, %p206
      %p208 = scmp.ne.s32.totalorder %s200, %s203
      %p209 = scmp.eq.s32.totalorder %s17, 0
      %p210 = por %p208, %p209
      %p211 = scmp.ne.s32.totalorder %s200, %s203
      %p212 = scmp.eq.s32.totalorder %s22, 1
      %p213 = por %p211, %p212
      %p214 = scmp.ne.s32.totalorder %s203, %s204
      %p215 = scmp.eq.s32.totalorder %s22, 0
      %p216 = por %p214, %p215
      %p217 = scmp.ne.s32.totalorder %s203, %s204
      %p218 = scmp.eq.s32.totalorder %s23, 1
      %p219 = por %p217, %p218
      %p221 = scmp.ne.s32.totalorder %s204, %s220
      %p222 = scmp.eq.s32.totalorder %s23, 0
      %p223 = por %p221, %p222
      %p224 = scmp.le.s32.totalorder 1, %s17
      %p225 = scmp.lt.s32.totalorder %s17, 3
      %p226 = pnand %p224, %p225
      %p227 = pneg %p226
      // Predicated region
      $region9: #{contrastive_model_forward.1} parent=5 // pred_check
        _
      $region10: #{contrastive_model_forward.1} parent=5 // pred_check_branch
        %229 = sbr.rel (%p226) target = $region12
      $region11: #{contrastive_model_forward.1} parent=5 // pred_region
        %s230 = ssub.s32 %s17, 1
        // Predicated region
        $region13: #{contrastive_model_forward.1} parent=11 // pred_check
          %p231 = pneg %p64
        $region14: #{contrastive_model_forward.1} parent=11 // pred_check_branch
          %233 = sbr.rel (%p231) target = $region16
        $region15: #{contrastive_model_forward.1} parent=11 // pred_region
          _
        $region16: #{contrastive_model_forward.1} parent=11 // pred_fallthru
          _
        // Predicated region
        $region17: #{contrastive_model_forward.1} parent=11 // pred_check
          %p234 = pneg %p85
        $region18: #{contrastive_model_forward.1} parent=11 // pred_check_branch
          %236 = sbr.rel (%p234) target = $region20
        $region19: #{contrastive_model_forward.1} parent=11 // pred_region
          _
        $region20: #{contrastive_model_forward.1} parent=11 // pred_fallthru
          _
        // Predicated region
        $region21: #{contrastive_model_forward.1} parent=11 // pred_check
          %p237 = pneg %p106
        $region22: #{contrastive_model_forward.1} parent=11 // pred_check_branch
          %239 = sbr.rel (%p237) target = $region24
        $region23: #{contrastive_model_forward.1} parent=11 // pred_region
          _
        $region24: #{contrastive_model_forward.1} parent=11 // pred_fallthru
          _
        // Predicated region
        $region25: #{contrastive_model_forward.1} parent=11 // pred_check
          %p240 = pneg %p127
        $region26: #{contrastive_model_forward.1} parent=11 // pred_check_branch
          %242 = sbr.rel (%p240) target = $region28
        $region27: #{contrastive_model_forward.1} parent=11 // pred_region
          _
        $region28: #{contrastive_model_forward.1} parent=11 // pred_fallthru
          _
        // Predicated region
        $region29: #{contrastive_model_forward.1} parent=11 // pred_check
          %p243 = pneg %p148
        $region30: #{contrastive_model_forward.1} parent=11 // pred_check_branch
          %245 = sbr.rel (%p243) target = $region32
        $region31: #{contrastive_model_forward.1} parent=11 // pred_region
          _
        $region32: #{contrastive_model_forward.1} parent=11 // pred_fallthru
          _
        // Predicated region
        $region33: #{contrastive_model_forward.1} parent=11 // pred_check
          %p246 = pneg %p169
        $region34: #{contrastive_model_forward.1} parent=11 // pred_check_branch
          %248 = sbr.rel (%p246) target = $region36
        $region35: #{contrastive_model_forward.1} parent=11 // pred_region
          _
        $region36: #{contrastive_model_forward.1} parent=11 // pred_fallthru
          _
        // Predicated region
        $region37: #{contrastive_model_forward.1} parent=11 // pred_check
          %p249 = pneg %p190
        $region38: #{contrastive_model_forward.1} parent=11 // pred_check_branch
          %251 = sbr.rel (%p249) target = $region40
        $region39: #{contrastive_model_forward.1} parent=11 // pred_region
          _
        $region40: #{contrastive_model_forward.1} parent=11 // pred_fallthru
          _
      $region12: #{contrastive_model_forward.1} parent=5 // pred_fallthru
        _
      %p252 = scmp.lt.s32.totalorder %s17, 2
      // Predicated region
      $region41: #{contrastive_model_forward.1} parent=5 // pred_check
        %p253 = pneg %p252
      $region42: #{contrastive_model_forward.1} parent=5 // pred_check_branch
        %255 = sbr.rel (%p253) target = $region44
      $region43: #{contrastive_model_forward.1} parent=5 // pred_region
        // Predicated region
        $region45: #{contrastive_model_forward.1} parent=43 // pred_check
          %p256 = pneg %p37
        $region46: #{contrastive_model_forward.1} parent=43 // pred_check_branch
          %258 = sbr.rel (%p256) target = $region48
        $region47: #{contrastive_model_forward.1} parent=43 // pred_region
          %s259 = smul.u32 32, %s17
          %p260 = scmp.lt.s32.totalorder %s259, 63
          %s261 = scalar_select %p260, %s259, 63
          %s262 = smul.addr %s261, 4
          %s263 = scalar_lea.vmem %s0, %s262
          %s264 = smul.u32 32, %s17
        $region48: #{contrastive_model_forward.1} parent=43 // pred_fallthru
          _
      $region44: #{contrastive_model_forward.1} parent=5 // pred_fallthru
        _
      %p265 = scmp.le.s32.totalorder 1, %s17
      %p266 = scmp.lt.s32.totalorder %s17, 3
      %p267 = pnand %p265, %p266
      %p268 = pneg %p267
      // Predicated region
      $region49: #{contrastive_model_forward.1} parent=5 // pred_check
        _
      $region50: #{contrastive_model_forward.1} parent=5 // pred_check_branch
        %270 = sbr.rel (%p267) target = $region52
      $region51: #{contrastive_model_forward.1} parent=5 // pred_region
        %s271 = ssub.s32 %s17, 1
        %s272 = smul.u32 32, %s22
        %p273 = scmp.lt.s32.totalorder %s272, 63
        %s274 = scalar_select %p273, %s272, 63
        %s275 = smul.addr %s274, 4
        %s276 = scalar_lea.vmem %s0, %s275
        %p277 = pneg %p43
        %p278 = pneg %p40
        %p279 = pneg %p64
        %p280 = pneg %p61
        %p281 = pneg %p85
        %p282 = pneg %p82
        %p283 = pneg %p106
        %p284 = pneg %p103
        %p285 = pneg %p127
        %p286 = pneg %p124
        %p287 = pneg %p148
        %p288 = pneg %p145
        %p289 = pneg %p169
        %p290 = pneg %p166
        %p291 = pneg %p190
        %p292 = pneg %p187
        %p293 = pneg %p216
        %p294 = pneg %p213
        %s295 = sand.u32 %s203, 1
        %s296 = scalar_lea.sflag [#allocation3], %s295
        %s297 = sand.u32 %s203, 1
        %s298 = scalar_lea.vmem [#allocation2], %s297
        %s299 = smul.u32 32, %s22
        %p300 = scmp.lt.s32.totalorder %s299, 63
        %s301 = scalar_select %p300, %s299, 63
        %s302 = smul.addr %s301, 4
        %s303 = scalar_lea.vmem %s0, %s302
        %s304 = smul.u32 32, %s22
        %v306 = vld [vmem:[%s303] sm:$0xf]
        %v307 = vld [vmem:[%s303 + $0x4] sm:$0xf]
        %v308 = vld [vmem:[%s303 + $0x8] sm:$0xf]
        %v309 = vld [vmem:[%s303 + $0xc] sm:$0xf]
        %v310 = vld [vmem:[%s303 + $0x10] sm:$0xf]
        %v311 = vld [vmem:[%s303 + $0x14] sm:$0xf]
        %v312 = vld [vmem:[%s303 + $0x18] sm:$0xf]
        %v313 = vld [vmem:[%s303 + $0x1c] sm:$0xf]
        %v314 = vld [vmem:[%s303 + $0x20] sm:$0xf]
        %v315 = vld [vmem:[%s303 + $0x24] sm:$0xf]
        %v316 = vld [vmem:[%s303 + $0x28] sm:$0xf]
        %v317 = vld [vmem:[%s303 + $0x2c] sm:$0xf]
        %v318 = vld [vmem:[%s303 + $0x30] sm:$0xf]
        %v319 = vld [vmem:[%s303 + $0x34] sm:$0xf]
        %v320 = vld [vmem:[%s303 + $0x38] sm:$0xf]
        %v321 = vld [vmem:[%s303 + $0x3c] sm:$0xf]
        %v322 = vld [vmem:[%s303 + $0x40] sm:$0xf]
        %v323 = vld [vmem:[%s303 + $0x44] sm:$0xf]
        %v324 = vld [vmem:[%s303 + $0x48] sm:$0xf]
        %v325 = vld [vmem:[%s303 + $0x4c] sm:$0xf]
        %v326 = vld [vmem:[%s303 + $0x50] sm:$0xf]
        %v327 = vld [vmem:[%s303 + $0x54] sm:$0xf]
        %v328 = vld [vmem:[%s303 + $0x58] sm:$0xf]
        %v329 = vld [vmem:[%s303 + $0x5c] sm:$0xf]
        %v330 = vld [vmem:[%s303 + $0x60] sm:$0xf]
        %v331 = vld [vmem:[%s303 + $0x64] sm:$0xf]
        %v332 = vld [vmem:[%s303 + $0x68] sm:$0xf]
        %v333 = vld [vmem:[%s303 + $0x6c] sm:$0xf]
        %v334 = vld [vmem:[%s303 + $0x70] sm:$0xf]
        %v335 = vld [vmem:[%s303 + $0x74] sm:$0xf]
        %v336 = vld [vmem:[%s303 + $0x78] sm:$0xf]
        %v337 = vld [vmem:[%s303 + $0x7c] sm:$0xf]
        %v338 = vld [vmem:[%s1] sm:$0xf]
        %v339 = vld [vmem:[%s1 + $0x4] sm:$0xf]
        %v340 = vld [vmem:[%s1 + $0x8] sm:$0xf]
        %v341 = vld [vmem:[%s1 + $0xc] sm:$0xf]
        %v342 = vld [vmem:[%s1 + $0x10] sm:$0xf]
        %v343 = vld [vmem:[%s1 + $0x14] sm:$0xf]
        %v344 = vld [vmem:[%s1 + $0x18] sm:$0xf]
        %v345 = vld [vmem:[%s1 + $0x1c] sm:$0xf]
        %v346 = vld [vmem:[%s1 + $0x20] sm:$0xf]
        %v347 = vld [vmem:[%s1 + $0x24] sm:$0xf]
        %v348 = vld [vmem:[%s1 + $0x28] sm:$0xf]
        %v349 = vld [vmem:[%s1 + $0x2c] sm:$0xf]
        %v350 = vld [vmem:[%s1 + $0x30] sm:$0xf]
        %v351 = vld [vmem:[%s1 + $0x34] sm:$0xf]
        %v352 = vld [vmem:[%s1 + $0x38] sm:$0xf]
        %v353 = vld [vmem:[%s1 + $0x3c] sm:$0xf]
        %v354 = vld [vmem:[%s2] sm:$0x1]
        %v356 = vlaneseq
        %v357 = vshrl.u32 %v356, 7
        %v358 = vsub.s32 0, %v357
        %v359 = vrot.slane %v354, %v358
        %v393 = vunpack.c.l.b16 %v306
        %v394 = vunpack.c.l.b16 %v307
        %v395 = vunpack.c.l.b16 %v308
        %v396 = vunpack.c.l.b16 %v309
        %v397 = vunpack.c.l.b16 %v310
        %v398 = vunpack.c.l.b16 %v311
        %v399 = vunpack.c.l.b16 %v312
        %v400 = vunpack.c.l.b16 %v313
        %v401 = vunpack.c.l.b16 %v314
        %v402 = vunpack.c.l.b16 %v315
        %v403 = vunpack.c.l.b16 %v316
        %v404 = vunpack.c.l.b16 %v317
        %v405 = vunpack.c.l.b16 %v318
        %v406 = vunpack.c.l.b16 %v319
        %v407 = vunpack.c.l.b16 %v320
        %v408 = vunpack.c.l.b16 %v321
        %v409 = vunpack.c.l.b16 %v322
        %v410 = vunpack.c.l.b16 %v323
        %v411 = vunpack.c.l.b16 %v324
        %v412 = vunpack.c.l.b16 %v325
        %v413 = vunpack.c.l.b16 %v326
        %v414 = vunpack.c.l.b16 %v327
        %v415 = vunpack.c.l.b16 %v328
        %v416 = vunpack.c.l.b16 %v329
        %v417 = vunpack.c.l.b16 %v330
        %v418 = vunpack.c.l.b16 %v331
        %v419 = vunpack.c.l.b16 %v332
        %v420 = vunpack.c.l.b16 %v333
        %v421 = vunpack.c.l.b16 %v334
        %v422 = vunpack.c.l.b16 %v335
        %v423 = vunpack.c.l.b16 %v336
        %v424 = vunpack.c.l.b16 %v337
        %v425 = vpack.c.b16 %v394, %v393
        %v426 = vpack.c.b16 %v396, %v395
        %v427 = vpack.c.b16 %v398, %v397
        %v428 = vpack.c.b16 %v400, %v399
        %v429 = vpack.c.b16 %v402, %v401
        %v430 = vpack.c.b16 %v404, %v403
        %v431 = vpack.c.b16 %v406, %v405
        %v432 = vpack.c.b16 %v408, %v407
        %v433 = vpack.c.b16 %v410, %v409
        %v434 = vpack.c.b16 %v412, %v411
        %v435 = vpack.c.b16 %v414, %v413
        %v436 = vpack.c.b16 %v416, %v415
        %v437 = vpack.c.b16 %v418, %v417
        %v438 = vpack.c.b16 %v420, %v419
        %v439 = vpack.c.b16 %v422, %v421
        %v440 = vpack.c.b16 %v424, %v423
        %v473 = vunpack.c.l.b16 %v338
        %v474 = vunpack.c.l.b16 %v339
        %v475 = vunpack.c.l.b16 %v340
        %v476 = vunpack.c.l.b16 %v341
        %v477 = vunpack.c.l.b16 %v342
        %v478 = vunpack.c.l.b16 %v343
        %v479 = vunpack.c.l.b16 %v344
        %v480 = vunpack.c.l.b16 %v345
        %v481 = vunpack.c.l.b16 %v346
        %v482 = vunpack.c.l.b16 %v347
        %v483 = vunpack.c.l.b16 %v348
        %v484 = vunpack.c.l.b16 %v349
        %v485 = vunpack.c.l.b16 %v350
        %v486 = vunpack.c.l.b16 %v351
        %v487 = vunpack.c.l.b16 %v352
        %v488 = vunpack.c.l.b16 %v353
        %v489 = vpack.c.b16 %v474, %v473
        %v490 = vpack.c.b16 %v476, %v475
        %v491 = vpack.c.b16 %v478, %v477
        %v492 = vpack.c.b16 %v480, %v479
        %v493 = vpack.c.b16 %v482, %v481
        %v494 = vpack.c.b16 %v484, %v483
        %v495 = vpack.c.b16 %v486, %v485
        %v496 = vpack.c.b16 %v488, %v487
        %505 = vmatprep.subr.bf16.mxu0 0
        %506 = vmatpush1.bf16.msra.mxu0 %v489
        %507 = vmatprep.subr.bf16.mxu0 0
        %508 = vmatpush1.bf16.msra.mxu0 %v490
        %509 = vmatprep.subr.bf16.mxu0 0
        %510 = vmatpush1.bf16.msra.mxu0 %v491
        %511 = vmatprep.subr.bf16.mxu0 0
        %512 = vmatpush1.bf16.msra.mxu0 %v492
        %513 = vmatprep.subr.bf16.mxu0 0
        %514 = vmatpush1.bf16.msra.mxu0 %v493
        %515 = vmatprep.subr.bf16.mxu0 0
        %516 = vmatpush1.bf16.msra.mxu0 %v494
        %517 = vmatprep.subr.bf16.mxu0 0
        %518 = vmatpush1.bf16.msra.mxu0 %v495
        %519 = vmatprep.subr.bf16.mxu0 0
        %520 = vmatpush1.bf16.msra.mxu0 %v496
        %521 = vmatprep.subr.bf16.mxu0 0
        %522 = vmatpush1.bf16.msra.mxu0 0
        %523 = vmatprep.subr.bf16.mxu0 0
        %524 = vmatpush1.bf16.msra.mxu0 0
        %525 = vmatprep.subr.bf16.mxu0 0
        %526 = vmatpush1.bf16.msra.mxu0 0
        %527 = vmatprep.subr.bf16.mxu0 0
        %528 = vmatpush1.bf16.msra.mxu0 0
        %529 = vmatprep.subr.bf16.mxu0 0
        %530 = vmatpush1.bf16.msra.mxu0 0
        %531 = vmatprep.subr.bf16.mxu0 0
        %532 = vmatpush1.bf16.msra.mxu0 0
        %533 = vmatprep.subr.bf16.mxu0 0
        %534 = vmatpush1.bf16.msra.mxu0 0
        %535 = vmatprep.subr.bf16.mxu0 0
        %536 = vmatpush1.bf16.msra.mxu0 0
        %537 = vmatprep.mubr.bf16.mxu0 0
        %538 = vmatmul.mubr.bf16.gmra.mrb[0].mxu0 %v425
        %v539 = vpop.f32.mrb[0].mxu0
        %v540 = vadd.f32 %v359, %v539
        %v541 = vpop.f32.mrb[0].mxu0
        %v542 = vpop.f32.mrb[0].mxu0
        %v543 = vadd.f32 %v359, %v542
        %v544 = vpop.f32.mrb[0].mxu0
        %545 = vmatprep.mubr.bf16.mxu0 0
        %546 = vmatmul.mubr.bf16.gmra.mrb[0].mxu0 %v426
        %v547 = vpop.f32.mrb[0].mxu0
        %v548 = vadd.f32 %v359, %v547
        %v549 = vpop.f32.mrb[0].mxu0
        %v550 = vpop.f32.mrb[0].mxu0
        %v551 = vadd.f32 %v359, %v550
        %v552 = vpop.f32.mrb[0].mxu0
        %553 = vmatprep.mubr.bf16.mxu0 0
        %554 = vmatmul.mubr.bf16.gmra.mrb[0].mxu0 %v427
        %v555 = vpop.f32.mrb[0].mxu0
        %v556 = vadd.f32 %v359, %v555
        %v557 = vpop.f32.mrb[0].mxu0
        %v558 = vpop.f32.mrb[0].mxu0
        %v559 = vadd.f32 %v359, %v558
        %v560 = vpop.f32.mrb[0].mxu0
        %561 = vmatprep.mubr.bf16.mxu0 0
        %562 = vmatmul.mubr.bf16.gmra.mrb[0].mxu0 %v428
        %v563 = vpop.f32.mrb[0].mxu0
        %v564 = vadd.f32 %v359, %v563
        %v565 = vpop.f32.mrb[0].mxu0
        %v566 = vpop.f32.mrb[0].mxu0
        %v567 = vadd.f32 %v359, %v566
        %v568 = vpop.f32.mrb[0].mxu0
        %569 = vmatprep.mubr.bf16.mxu0 0
        %570 = vmatmul.mubr.bf16.gmra.mrb[0].mxu0 %v429
        %v571 = vpop.f32.mrb[0].mxu0
        %v572 = vadd.f32 %v359, %v571
        %v573 = vpop.f32.mrb[0].mxu0
        %v574 = vpop.f32.mrb[0].mxu0
        %v575 = vadd.f32 %v359, %v574
        %v576 = vpop.f32.mrb[0].mxu0
        %577 = vmatprep.mubr.bf16.mxu0 0
        %578 = vmatmul.mubr.bf16.gmra.mrb[0].mxu0 %v430
        %v579 = vpop.f32.mrb[0].mxu0
        %v580 = vadd.f32 %v359, %v579
        %v581 = vpop.f32.mrb[0].mxu0
        %v582 = vpop.f32.mrb[0].mxu0
        %v583 = vadd.f32 %v359, %v582
        %v584 = vpop.f32.mrb[0].mxu0
        %585 = vmatprep.mubr.bf16.mxu0 0
        %586 = vmatmul.mubr.bf16.gmra.mrb[0].mxu0 %v431
        %v587 = vpop.f32.mrb[0].mxu0
        %v588 = vadd.f32 %v359, %v587
        %v589 = vpop.f32.mrb[0].mxu0
        %v590 = vpop.f32.mrb[0].mxu0
        %v591 = vadd.f32 %v359, %v590
        %v592 = vpop.f32.mrb[0].mxu0
        %593 = vmatprep.mubr.bf16.mxu0 0
        %594 = vmatmul.mubr.bf16.gmra.mrb[0].mxu0 %v432
        %v595 = vpop.f32.mrb[0].mxu0
        %v596 = vadd.f32 %v359, %v595
        %v597 = vpop.f32.mrb[0].mxu0
        %v598 = vpop.f32.mrb[0].mxu0
        %v599 = vadd.f32 %v359, %v598
        %v600 = vpop.f32.mrb[0].mxu0
        %601 = vmatprep.mubr.bf16.mxu0 0
        %602 = vmatmul.mubr.bf16.gmra.mrb[0].mxu0 %v433
        %v603 = vpop.f32.mrb[0].mxu0
        %v604 = vadd.f32 %v359, %v603
        %v605 = vpop.f32.mrb[0].mxu0
        %v606 = vpop.f32.mrb[0].mxu0
        %v607 = vadd.f32 %v359, %v606
        %v608 = vpop.f32.mrb[0].mxu0
        %609 = vmatprep.mubr.bf16.mxu0 0
        %610 = vmatmul.mubr.bf16.gmra.mrb[0].mxu0 %v434
        %v611 = vpop.f32.mrb[0].mxu0
        %v612 = vadd.f32 %v359, %v611
        %v613 = vpop.f32.mrb[0].mxu0
        %v614 = vpop.f32.mrb[0].mxu0
        %v615 = vadd.f32 %v359, %v614
        %v616 = vpop.f32.mrb[0].mxu0
        %617 = vmatprep.mubr.bf16.mxu0 0
        %618 = vmatmul.mubr.bf16.gmra.mrb[0].mxu0 %v435
        %v619 = vpop.f32.mrb[0].mxu0
        %v620 = vadd.f32 %v359, %v619
        %v621 = vpop.f32.mrb[0].mxu0
        %v622 = vpop.f32.mrb[0].mxu0
        %v623 = vadd.f32 %v359, %v622
        %v624 = vpop.f32.mrb[0].mxu0
        %625 = vmatprep.mubr.bf16.mxu0 0
        %626 = vmatmul.mubr.bf16.gmra.mrb[0].mxu0 %v436
        %v627 = vpop.f32.mrb[0].mxu0
        %v628 = vadd.f32 %v359, %v627
        %v629 = vpop.f32.mrb[0].mxu0
        %v630 = vpop.f32.mrb[0].mxu0
        %v631 = vadd.f32 %v359, %v630
        %v632 = vpop.f32.mrb[0].mxu0
        %633 = vmatprep.mubr.bf16.mxu0 0
        %634 = vmatmul.mubr.bf16.gmra.mrb[0].mxu0 %v437
        %v635 = vpop.f32.mrb[0].mxu0
        %v636 = vadd.f32 %v359, %v635
        %v637 = vpop.f32.mrb[0].mxu0
        %v638 = vpop.f32.mrb[0].mxu0
        %v639 = vadd.f32 %v359, %v638
        %v640 = vpop.f32.mrb[0].mxu0
        %641 = vmatprep.mubr.bf16.mxu0 0
        %642 = vmatmul.mubr.bf16.gmra.mrb[0].mxu0 %v438
        %v643 = vpop.f32.mrb[0].mxu0
        %v644 = vadd.f32 %v359, %v643
        %v645 = vpop.f32.mrb[0].mxu0
        %v646 = vpop.f32.mrb[0].mxu0
        %v647 = vadd.f32 %v359, %v646
        %v648 = vpop.f32.mrb[0].mxu0
        %649 = vmatprep.mubr.bf16.mxu0 0
        %650 = vmatmul.mubr.bf16.gmra.mrb[0].mxu0 %v439
        %v651 = vpop.f32.mrb[0].mxu0
        %v652 = vadd.f32 %v359, %v651
        %v653 = vpop.f32.mrb[0].mxu0
        %v654 = vpop.f32.mrb[0].mxu0
        %v655 = vadd.f32 %v359, %v654
        %v656 = vpop.f32.mrb[0].mxu0
        %657 = vmatprep.mubr.bf16.mxu0 0
        %658 = vmatmul.mubr.bf16.gmra.mrb[0].mxu0 %v440
        %v659 = vpop.f32.mrb[0].mxu0
        %v660 = vadd.f32 %v359, %v659
        %v661 = vpop.f32.mrb[0].mxu0
        %v662 = vpop.f32.mrb[0].mxu0
        %v663 = vadd.f32 %v359, %v662
        %v664 = vpop.f32.mrb[0].mxu0
        %665 = vdwg.mxu0
        %v666 = vmax.f32 %v540, 0.0
        %v667 = vmax.f32 %v543, 0.0
        %v668 = vmax.f32 %v548, 0.0
        %v669 = vmax.f32 %v551, 0.0
        %v670 = vmax.f32 %v556, 0.0
        %v671 = vmax.f32 %v559, 0.0
        %v672 = vmax.f32 %v564, 0.0
        %v673 = vmax.f32 %v567, 0.0
        %v674 = vmax.f32 %v572, 0.0
        %v675 = vmax.f32 %v575, 0.0
        %v676 = vmax.f32 %v580, 0.0
        %v677 = vmax.f32 %v583, 0.0
        %v678 = vmax.f32 %v588, 0.0
        %v679 = vmax.f32 %v591, 0.0
        %v680 = vmax.f32 %v596, 0.0
        %v681 = vmax.f32 %v599, 0.0
        %v682 = vmax.f32 %v604, 0.0
        %v683 = vmax.f32 %v607, 0.0
        %v684 = vmax.f32 %v612, 0.0
        %v685 = vmax.f32 %v615, 0.0
        %v686 = vmax.f32 %v620, 0.0
        %v687 = vmax.f32 %v623, 0.0
        %v688 = vmax.f32 %v628, 0.0
        %v689 = vmax.f32 %v631, 0.0
        %v690 = vmax.f32 %v636, 0.0
        %v691 = vmax.f32 %v639, 0.0
        %v692 = vmax.f32 %v644, 0.0
        %v693 = vmax.f32 %v647, 0.0
        %v694 = vmax.f32 %v652, 0.0
        %v695 = vmax.f32 %v655, 0.0
        %v696 = vmax.f32 %v660, 0.0
        %v697 = vmax.f32 %v663, 0.0
        %v698 = vld [vmem:[%s3] sm:$0xff]
        %v699 = vld [vmem:[%s3 + $0x8] sm:$0xff]
        %700 = vmatprep.subr.mxu0 0.0
        %701 = vmatpush1.msra.mxu0 %v666
        %702 = vmatprep.subr.mxu0 0.0
        %703 = vmatpush1.msra.mxu0 %v667
        %704 = vmatprep.subr.mxu0 0.0
        %705 = vmatpush1.msra.mxu0 %v668
        %706 = vmatprep.subr.mxu0 0.0
        %707 = vmatpush1.msra.mxu0 %v669
        %708 = vmatprep.subr.mxu0 0.0
        %709 = vmatpush1.msra.mxu0 %v670
        %710 = vmatprep.subr.mxu0 0.0
        %711 = vmatpush1.msra.mxu0 %v671
        %712 = vmatprep.subr.mxu0 0.0
        %713 = vmatpush1.msra.mxu0 %v672
        %714 = vmatprep.subr.mxu0 0.0
        %715 = vmatpush1.msra.mxu0 %v673
        %716 = vmatprep.subr.mxu0 0.0
        %717 = vmatpush1.msra.mxu0 %v674
        %718 = vmatprep.subr.mxu0 0.0
        %719 = vmatpush1.msra.mxu0 %v675
        %720 = vmatprep.subr.mxu0 0.0
        %721 = vmatpush1.msra.mxu0 %v676
        %722 = vmatprep.subr.mxu0 0.0
        %723 = vmatpush1.msra.mxu0 %v677
        %724 = vmatprep.subr.mxu0 0.0
        %725 = vmatpush1.msra.mxu0 %v678
        %726 = vmatprep.subr.mxu0 0.0
        %727 = vmatpush1.msra.mxu0 %v679
        %728 = vmatprep.subr.mxu0 0.0
        %729 = vmatpush1.msra.mxu0 %v680
        %730 = vmatprep.subr.mxu0 0.0
        %731 = vmatpush1.msra.mxu0 %v681
        %732 = vmatprep.subr.mxu0 0.0
        %733 = vmatpush1.msra.mxu0 %v682
        %734 = vmatprep.subr.mxu0 0.0
        %735 = vmatpush1.msra.mxu0 %v683
        %736 = vmatprep.subr.mxu0 0.0
        %737 = vmatpush1.msra.mxu0 %v684
        %738 = vmatprep.subr.mxu0 0.0
        %739 = vmatpush1.msra.mxu0 %v685
        %740 = vmatprep.subr.mxu0 0.0
        %741 = vmatpush1.msra.mxu0 %v686
        %742 = vmatprep.subr.mxu0 0.0
        %743 = vmatpush1.msra.mxu0 %v687
        %744 = vmatprep.subr.mxu0 0.0
        %745 = vmatpush1.msra.mxu0 %v688
        %746 = vmatprep.subr.mxu0 0.0
        %747 = vmatpush1.msra.mxu0 %v689
        %748 = vmatprep.subr.mxu0 0.0
        %749 = vmatpush1.msra.mxu0 %v690
        %750 = vmatprep.subr.mxu0 0.0
        %751 = vmatpush1.msra.mxu0 %v691
        %752 = vmatprep.subr.mxu0 0.0
        %753 = vmatpush1.msra.mxu0 %v692
        %754 = vmatprep.subr.mxu0 0.0
        %755 = vmatpush1.msra.mxu0 %v693
        %756 = vmatprep.subr.mxu0 0.0
        %757 = vmatpush1.msra.mxu0 %v694
        %758 = vmatprep.subr.mxu0 0.0
        %759 = vmatpush1.msra.mxu0 %v695
        %760 = vmatprep.subr.mxu0 0.0
        %761 = vmatpush1.msra.mxu0 %v696
        %762 = vmatprep.subr.mxu0 0.0
        %763 = vmatpush1.msra.mxu0 %v697
        %764 = vmatprep.mubr.f32.mxu0 %v699
        %765 = vmatmul.mubr.f32.gmra.mrb[0].mxu0 %v698
        %v766 = vpop.f32.mrb[0].mxu0
        %v767 = vadd.f32 0.0, %v766
        %v768 = vpop.f32.mrb[0].mxu0
        %769 = vdwg.mxu0
        %v770 = vpack.c.bf16 %v767, %v767
        %v771 = vld [vmem:[%s4] sm:$0xf]
        %v772 = vld [vmem:[%s4 + $0x4] sm:$0xf]
        %v773 = vld [vmem:[%s4 + $0x8] sm:$0xf]
        %v774 = vld [vmem:[%s4 + $0xc] sm:$0xf]
        %v775 = vld [vmem:[%s4 + $0x10] sm:$0xf]
        %v776 = vld [vmem:[%s4 + $0x14] sm:$0xf]
        %v777 = vld [vmem:[%s4 + $0x18] sm:$0xf]
        %v778 = vld [vmem:[%s4 + $0x1c] sm:$0xf]
        %v779 = vld [vmem:[%s4 + $0x20] sm:$0xf]
        %v780 = vld [vmem:[%s4 + $0x24] sm:$0xf]
        %v781 = vld [vmem:[%s4 + $0x28] sm:$0xf]
        %v782 = vld [vmem:[%s4 + $0x2c] sm:$0xf]
        %v783 = vld [vmem:[%s4 + $0x30] sm:$0xf]
        %v784 = vld [vmem:[%s4 + $0x34] sm:$0xf]
        %v785 = vld [vmem:[%s4 + $0x38] sm:$0xf]
        %v786 = vld [vmem:[%s4 + $0x3c] sm:$0xf]
        %v787 = vld [vmem:[%s5] sm:$0x1]
        %v789 = vlaneseq
        %v790 = vshrl.u32 %v789, 7
        %v791 = vsub.s32 0, %v790
        %v792 = vrot.slane %v787, %v791
        %v810 = vunpack.c.l.b16 %v771
        %v811 = vunpack.c.l.b16 %v772
        %v812 = vunpack.c.l.b16 %v773
        %v813 = vunpack.c.l.b16 %v774
        %v814 = vunpack.c.l.b16 %v775
        %v815 = vunpack.c.l.b16 %v776
        %v816 = vunpack.c.l.b16 %v777
        %v817 = vunpack.c.l.b16 %v778
        %v818 = vunpack.c.l.b16 %v779
        %v819 = vunpack.c.l.b16 %v780
        %v820 = vunpack.c.l.b16 %v781
        %v821 = vunpack.c.l.b16 %v782
        %v822 = vunpack.c.l.b16 %v783
        %v823 = vunpack.c.l.b16 %v784
        %v824 = vunpack.c.l.b16 %v785
        %v825 = vunpack.c.l.b16 %v786
        %v826 = vpack.c.b16 %v811, %v810
        %v827 = vpack.c.b16 %v813, %v812
        %v828 = vpack.c.b16 %v815, %v814
        %v829 = vpack.c.b16 %v817, %v816
        %v830 = vpack.c.b16 %v819, %v818
        %v831 = vpack.c.b16 %v821, %v820
        %v832 = vpack.c.b16 %v823, %v822
        %v833 = vpack.c.b16 %v825, %v824
        %842 = vmatprep.subr.bf16.mxu0 0
        %843 = vmatpush1.bf16.msra.mxu0 %v826
        %844 = vmatprep.subr.bf16.mxu0 0
        %845 = vmatpush1.bf16.msra.mxu0 %v827
        %846 = vmatprep.subr.bf16.mxu0 0
        %847 = vmatpush1.bf16.msra.mxu0 %v828
        %848 = vmatprep.subr.bf16.mxu0 0
        %849 = vmatpush1.bf16.msra.mxu0 %v829
        %850 = vmatprep.subr.bf16.mxu0 0
        %851 = vmatpush1.bf16.msra.mxu0 %v830
        %852 = vmatprep.subr.bf16.mxu0 0
        %853 = vmatpush1.bf16.msra.mxu0 %v831
        %854 = vmatprep.subr.bf16.mxu0 0
        %855 = vmatpush1.bf16.msra.mxu0 %v832
        %856 = vmatprep.subr.bf16.mxu0 0
        %857 = vmatpush1.bf16.msra.mxu0 %v833
        %858 = vmatprep.subr.bf16.mxu0 0
        %859 = vmatpush1.bf16.msra.mxu0 0
        %860 = vmatprep.subr.bf16.mxu0 0
        %861 = vmatpush1.bf16.msra.mxu0 0
        %862 = vmatprep.subr.bf16.mxu0 0
        %863 = vmatpush1.bf16.msra.mxu0 0
        %864 = vmatprep.subr.bf16.mxu0 0
        %865 = vmatpush1.bf16.msra.mxu0 0
        %866 = vmatprep.subr.bf16.mxu0 0
        %867 = vmatpush1.bf16.msra.mxu0 0
        %868 = vmatprep.subr.bf16.mxu0 0
        %869 = vmatpush1.bf16.msra.mxu0 0
        %870 = vmatprep.subr.bf16.mxu0 0
        %871 = vmatpush1.bf16.msra.mxu0 0
        %872 = vmatprep.subr.bf16.mxu0 0
        %873 = vmatpush1.bf16.msra.mxu0 0
        %874 = vmatprep.mubr.bf16.mxu0 0
        %875 = vmatmul.mubr.bf16.gmra.mrb[0].mxu0 %v770
        %v876 = vpop.f32.mrb[0].mxu0
        %v877 = vadd.f32 %v792, %v876
        %v878 = vpop.f32.mrb[0].mxu0
        %v879 = vpop.f32.mrb[0].mxu0
        %v880 = vpop.f32.mrb[0].mxu0
        %881 = vdwg.mxu0
        %v882 = vmax.f32 %v877, 0.0
        %v883 = vpack.c.bf16 %v882, %v882
        %v884 = vld [vmem:[%s6] sm:$0xf]
        %v885 = vld [vmem:[%s6 + $0x4] sm:$0xf]
        %v886 = vld [vmem:[%s6 + $0x8] sm:$0xf]
        %v887 = vld [vmem:[%s6 + $0xc] sm:$0xf]
        %v888 = vld [vmem:[%s6 + $0x10] sm:$0xf]
        %v889 = vld [vmem:[%s6 + $0x14] sm:$0xf]
        %v890 = vld [vmem:[%s6 + $0x18] sm:$0xf]
        %v891 = vld [vmem:[%s6 + $0x1c] sm:$0xf]
        %v892 = vld [vmem:[%s6 + $0x20] sm:$0xf]
        %v893 = vld [vmem:[%s6 + $0x24] sm:$0xf]
        %v894 = vld [vmem:[%s6 + $0x28] sm:$0xf]
        %v895 = vld [vmem:[%s6 + $0x2c] sm:$0xf]
        %v896 = vld [vmem:[%s6 + $0x30] sm:$0xf]
        %v897 = vld [vmem:[%s6 + $0x34] sm:$0xf]
        %v898 = vld [vmem:[%s6 + $0x38] sm:$0xf]
        %v899 = vld [vmem:[%s6 + $0x3c] sm:$0xf]
        %v900 = vld [vmem:[%s7] sm:$0x1]
        %v902 = vlaneseq
        %v903 = vshrl.u32 %v902, 7
        %v904 = vsub.s32 0, %v903
        %v905 = vrot.slane %v900, %v904
        %v923 = vunpack.c.l.b16 %v884
        %v924 = vunpack.c.l.b16 %v885
        %v925 = vunpack.c.l.b16 %v886
        %v926 = vunpack.c.l.b16 %v887
        %v927 = vunpack.c.l.b16 %v888
        %v928 = vunpack.c.l.b16 %v889
        %v929 = vunpack.c.l.b16 %v890
        %v930 = vunpack.c.l.b16 %v891
        %v931 = vunpack.c.l.b16 %v892
        %v932 = vunpack.c.l.b16 %v893
        %v933 = vunpack.c.l.b16 %v894
        %v934 = vunpack.c.l.b16 %v895
        %v935 = vunpack.c.l.b16 %v896
        %v936 = vunpack.c.l.b16 %v897
        %v937 = vunpack.c.l.b16 %v898
        %v938 = vunpack.c.l.b16 %v899
        %v939 = vpack.c.b16 %v924, %v923
        %v940 = vpack.c.b16 %v926, %v925
        %v941 = vpack.c.b16 %v928, %v927
        %v942 = vpack.c.b16 %v930, %v929
        %v943 = vpack.c.b16 %v932, %v931
        %v944 = vpack.c.b16 %v934, %v933
        %v945 = vpack.c.b16 %v936, %v935
        %v946 = vpack.c.b16 %v938, %v937
        %955 = vmatprep.subr.bf16.mxu0 0
        %956 = vmatpush1.bf16.msra.mxu0 %v939
        %957 = vmatprep.subr.bf16.mxu0 0
        %958 = vmatpush1.bf16.msra.mxu0 %v940
        %959 = vmatprep.subr.bf16.mxu0 0
        %960 = vmatpush1.bf16.msra.mxu0 %v941
        %961 = vmatprep.subr.bf16.mxu0 0
        %962 = vmatpush1.bf16.msra.mxu0 %v942
        %963 = vmatprep.subr.bf16.mxu0 0
        %964 = vmatpush1.bf16.msra.mxu0 %v943
        %965 = vmatprep.subr.bf16.mxu0 0
        %966 = vmatpush1.bf16.msra.mxu0 %v944
        %967 = vmatprep.subr.bf16.mxu0 0
        %968 = vmatpush1.bf16.msra.mxu0 %v945
        %969 = vmatprep.subr.bf16.mxu0 0
        %970 = vmatpush1.bf16.msra.mxu0 %v946
        %971 = vmatprep.subr.bf16.mxu0 0
        %972 = vmatpush1.bf16.msra.mxu0 0
        %973 = vmatprep.subr.bf16.mxu0 0
        %974 = vmatpush1.bf16.msra.mxu0 0
        %975 = vmatprep.subr.bf16.mxu0 0
        %976 = vmatpush1.bf16.msra.mxu0 0
        %977 = vmatprep.subr.bf16.mxu0 0
        %978 = vmatpush1.bf16.msra.mxu0 0
        %979 = vmatprep.subr.bf16.mxu0 0
        %980 = vmatpush1.bf16.msra.mxu0 0
        %981 = vmatprep.subr.bf16.mxu0 0
        %982 = vmatpush1.bf16.msra.mxu0 0
        %983 = vmatprep.subr.bf16.mxu0 0
        %984 = vmatpush1.bf16.msra.mxu0 0
        %985 = vmatprep.subr.bf16.mxu0 0
        %986 = vmatpush1.bf16.msra.mxu0 0
        %987 = vmatprep.mubr.bf16.mxu0 0
        %988 = vmatmul.mubr.bf16.gmra.mrb[0].mxu0 %v883
        %v989 = vpop.f32.mrb[0].mxu0
        %v990 = vadd.f32 %v905, %v989
        %v991 = vpop.f32.mrb[0].mxu0
        %v992 = vpop.f32.mrb[0].mxu0
        %v993 = vpop.f32.mrb[0].mxu0
        %994 = vdwg.mxu0
        %v995 = vmul.f32 %v990, %v990
        %vm996 = vcmask 1040384
        %v997 = vsel %vm996, %v995, 0.0
        %998 = vadd.xlane.f32.xlu0 %v997
        %v999 = vpop.xlane.xlu0 %998
        %v1000 = vmax.f32 %v999, 1e-24
        %v1001 = vrsqrt.pop %v1000
        %v1002 = vmul.f32 %v990, %v1001
        %1003 = vst [vmem:[%s298] sm:$0x1] %v1002
        %s1004 = sand.u32 %s203, 1
        %s1005 = scalar_lea.sflag [#allocation3], %s1004
        %s1006 = sand.u32 %s203, 1
        %s1007 = scalar_lea.vmem [#allocation2], %s1006
        // Predicated region
        $region53: #{contrastive_model_forward.1} parent=51 // pred_check
          %p1008 = pneg %p213
        $region54: #{contrastive_model_forward.1} parent=51 // pred_check_branch
          %1010 = sbr.rel (%p1008) target = $region56
        $region55: #{contrastive_model_forward.1} parent=51 // pred_region
          %s1012 = ssub.s32 16, 16
          %1013 = vsyncadd %s1005, %s1012
          %s1014 = smul.addr %s22, 16
          %s1015 = scalar_lea.hbm %s8, %s1014
          %s1017 = sshll.u32 %s1007, 4
          %s1018 = int_to_ptr.vmem [resolvable:$true] %s1017
          %1020 = dma.vmem_to_hbm [thread:$0]  %s1018, 16, %s1015, %s1005
        $region56: #{contrastive_model_forward.1} parent=51 // pred_fallthru
          _
      $region52: #{contrastive_model_forward.1} parent=5 // pred_fallthru
        _
      %p1021 = scmp.le.s32.totalorder 2, %s17
      // Predicated region
      $region57: #{contrastive_model_forward.1} parent=5 // pred_check
        %p1022 = pneg %p1021
      $region58: #{contrastive_model_forward.1} parent=5 // pred_check_branch
        %1024 = sbr.rel (%p1022) target = $region60
      $region59: #{contrastive_model_forward.1} parent=5 // pred_region
        %s1025 = ssub.s32 %s17, 2
        // Predicated region
        $region61: #{contrastive_model_forward.1} parent=59 // pred_check
          %p1026 = pneg %p219
        $region62: #{contrastive_model_forward.1} parent=59 // pred_check_branch
          %1028 = sbr.rel (%p1026) target = $region64
        $region63: #{contrastive_model_forward.1} parent=59 // pred_region
          %s1029 = sand.u32 %s204, 1
          %s1030 = scalar_lea.sflag [#allocation3], %s1029
          %s1031 = sand.u32 %s204, 1
          %s1032 = scalar_lea.vmem [#allocation2], %s1031
          %1033 = dma.done %s1030, 16
        $region64: #{contrastive_model_forward.1} parent=59 // pred_fallthru
          _
      $region60: #{contrastive_model_forward.1} parent=5 // pred_fallthru
        _
    $region6: #{contrastive_model_forward.1} parent=1 // loop_footer
      %s21 = sadd.s32 1, %s17
    $region7: #{contrastive_model_forward.1} parent=1 // loop_footer_branch
      %16 = sbr.rel target = $region3
    $region8: #{contrastive_model_forward.1} parent=1 // loop_exit
      _
    %1034 = vsyncpa [#allocation3], 1
    %s1035 = scalar_lea.sflag [#allocation3], 1
    %1036 = vsyncpa %s1035, 1

</llo_original>
